<compile_context>
chip_gen: v7x
topology: tpu7x:2x2x1
jax: 0.10.0
libtpu: 0.0.40
codegen_flags: <defaults>
</compile_context>

<pallas_src>
import jax
import jax.numpy as jnp
from jax.experimental import pallas as pl
from jax.experimental.pallas import tpu as pltpu


def _pos_emb_kernel(w_ref, o_ref):
    # w_ref: (1, S*D)  flattened positional table rows [0, S)  (VMEM-resident)
    # o_ref: (TB, S*D) lane-dense output slab for TB batch rows
    o_ref[...] = jnp.broadcast_to(w_ref[...], o_ref.shape)


def positional_embedding(
    x: jax.Array,
    weight: jax.Array,
    *,
    max_block_bytes: int = 8 * 1024 * 1024,
) -> jax.Array:
    """Pallas equivalent of PositionalEmbedding.forward.

    Args:
      x:      (B, S) integer tensor; only its shape is used (matches PyTorch).
      weight: (max_len, D) embedding table.
      max_block_bytes: approx. per-buffer VMEM budget for one output block.

    Returns:
      (B, S, D) positional embeddings, out[b, s] = weight[s].
    """
    B, S = x.shape
    max_len, D = weight.shape
    assert S <= max_len, "seq_len must not exceed max_len"

    # Slice the needed rows in the wrapper (robust for any S <= max_len) and
    # flatten to one lane-dense row.
    w_flat = weight[:S].reshape(1, S * D)

    # Batch tile size: as many rows as fit the per-buffer budget.
    row_bytes = S * D * weight.dtype.itemsize
    tb = min(B, max(1, max_block_bytes // max(row_bytes, 1)))
    if tb < B:
        # Sublane-aligned tiles; Pallas masks the ragged tail block.
        tb = max(8, (tb // 8) * 8)
    num_blocks = pl.cdiv(B, tb)

    out2d = pl.pallas_call(
        _pos_emb_kernel,
        out_shape=jax.ShapeDtypeStruct((B, S * D), weight.dtype),
        grid=(num_blocks,),
        # Weight block == full (1, S*D) array; constant index_map keeps it
        # resident in VMEM across all grid steps.
        in_specs=[pl.BlockSpec((1, S * D), lambda i: (0, 0))],
        # One big lane-dense output slab per grid step.
        out_specs=pl.BlockSpec((tb, S * D), lambda i: (i, 0)),
        compiler_params=pltpu.CompilerParams(
            dimension_semantics=("parallel",)
        ),
    )(w_flat)

    return out2d.reshape(B, S, D)


if __name__ == "__main__":
    key = jax.random.PRNGKey(0)
    k_w, k_x = jax.random.split(key)

    # Small shapes consistent with the module: batch=2, seq_len=8,
    # max_len=16, embedding_dim=128.
    B, S = 2, 8
    MAX_LEN, D = 16, 128

    # Deterministic parameter init matching nn.init.normal_(mean=0, std=D**-0.5).
    weight = (jax.random.normal(k_w, (MAX_LEN, D), dtype=jnp.float32)
              * (D ** -0.5))
    # Input token ids; values are unused, only the shape matters.
    x = jax.random.randint(k_x, (B, S), 0, 100, dtype=jnp.int32)

    out = positional_embedding(x, weight)
    out = jax.block_until_ready(out)
    ref = jnp.broadcast_to(weight[:S][None, :, :], (B, S, D))
    assert out.shape == (B, S, D)
    assert jnp.allclose(out, ref), "mismatch vs reference (aligned S)"

    # Second check with a non-8-aligned seq_len to exercise the wrapper slice.
    B2, S2 = 3, 6
    x2 = jax.random.randint(k_x, (B2, S2), 0, 100, dtype=jnp.int32)
    out2 = jax.block_until_ready(positional_embedding(x2, weight))
    ref2 = jnp.broadcast_to(weight[:S2][None, :, :], (B2, S2, D))
    assert out2.shape == (B2, S2, D)
    assert jnp.allclose(out2, ref2), "mismatch vs reference (unaligned S)"

    print("KERNEL_OK")
</pallas_src>

<mosaic_0001>
module attributes {stable_mosaic.version = 11 : i64} {
  func.func @_pos_emb_kernel(%arg0: i32, %arg1: memref<1x1024xf32, #tpu.memory_space<vmem>>, %arg2: memref<2x1024xf32, #tpu.memory_space<vmem>>) attributes {dimension_semantics = [#tpu.dimension_semantics<parallel>], iteration_bounds = array<i64: 1>, scalar_prefetch = 0 : i64, scratch_operands = 0 : i64, tpu.core_type = #tpu.core_type<tc>, window_params = [{pipeline_mode = #tpu.pipeline_mode<synchronous>, transform_indices = @transform_0, window_bounds = array<i64: 1, 1024>}, {transform_indices = @transform_1, window_bounds = array<i64: 2, 1024>}]} {
    %c0 = arith.constant 0 : index
    %c0_0 = arith.constant 0 : index
    %0 = vector.load %arg1[%c0, %c0_0] : memref<1x1024xf32, #tpu.memory_space<vmem>>, vector<1x1024xf32>
    %1 = vector.shape_cast %0 : vector<1x1024xf32> to vector<1x1024xf32>
    %2 = vector.broadcast %1 : vector<1x1024xf32> to vector<2x1024xf32>
    %c0_1 = arith.constant 0 : index
    %c0_2 = arith.constant 0 : index
    %3 = vector.load %arg2[%c0_1, %c0_2] : memref<2x1024xf32, #tpu.memory_space<vmem>>, vector<2x1024xf32>
    tpu.vector_store %arg2[%c0_1, %c0_2], %2 {strides = array<i32>} : memref<2x1024xf32, #tpu.memory_space<vmem>>, vector<2x1024xf32>,
    return
  }
  func.func @transform_0(%arg0: i32) -> (i32, i32) {
    %c0_i32 = arith.constant 0 : i32
    %c0_i32_0 = arith.constant 0 : i32
    %c0_i32_1 = arith.constant 0 : i32
    return %c0_i32, %c0_i32_0 : i32, i32
  }
  func.func @transform_1(%arg0: i32) -> (i32, i32) {
    %c0_i32 = arith.constant 0 : i32
    %c0_i32_0 = arith.constant 0 : i32
    return %arg0, %c0_i32 : i32, i32
  }
}

</mosaic_0001>

<llo_original>
// kernel: tpu_custom_call.1
$region0: #{tpu_custom_call.1}
  #allocation0 [shape = 'u32[]', space=smem, size = 0x4, offset = 0x4, fixed_abs, tag = 'smem constant byte address 0x4 - core index']
  #allocation1 [shape = 'u32[144,128]{1,0:T(1,128)}', space=vmem, size = 0x12000, scoped, tag = 'internal scratch']
  %s0 = inlined_call_operand.hbm [shape: f32[1,1024], index: 0, kind: input, shape index: {}]
  %s1 = inlined_call_operand.hbm [shape: f32[2,1024], index: 1, kind: output, shape index: {}]
  %s2 = sld [smem:[#allocation0]]
  $region18: #{tpu_custom_call.1} parent=0
    _
  %s4 = ssub.s32 1, %s2
  %s5 = scalar_select 0, %s4, %s2
  $region1: #{tpu_custom_call.1} parent=0
    #allocation2 [shape = 'u8[4096]{0}', space=vmem, size = 0x1000, scoped, tag = 'input window, operand 0, single buffered']
    #allocation3 [shape = 's32[1]{0}', space=sflag, size = 0x4, scoped, tag = 'scoped memory for tpu_custom_call.1']
    #allocation4 [shape = 's32[1]{0}', space=sflag, size = 0x4, scoped, tag = 'scoped memory for tpu_custom_call.1']
    #allocation5 [shape = 'u8[8192]{0}', space=vmem, size = 0x2000, scoped, tag = 'output window, operand 0, single buffered']
    %6 = vsyncpa [#allocation3], 0
    %7 = vsyncpa [#allocation4], 0
    // Predicated region
    $region2: #{tpu_custom_call.1} parent=1 // pred_check
      _
    $region3: #{tpu_custom_call.1} parent=1 // pred_check_branch
      %9 = sbr.rel (0) target = $region5
    $region4: #{tpu_custom_call.1} parent=1 // pred_region
      %s11 = ssub.s32 128, 128
      %12 = vsyncadd [#allocation3], %s11
      %s14 = sshll.u32 [#allocation2], 4
      %s15 = int_to_ptr.vmem [resolvable:$true] %s14
      %17 = dma.hbm_to_vmem [thread:$0]  %s0, 128, %s15, [#allocation3]
    $region5: #{tpu_custom_call.1} parent=1 // pred_fallthru
      _
    // Predicated region
    $region6: #{tpu_custom_call.1} parent=1 // pred_check
      _
    $region7: #{tpu_custom_call.1} parent=1 // pred_check_branch
      %19 = sbr.rel (0) target = $region9
    $region8: #{tpu_custom_call.1} parent=1 // pred_region
      %20 = dma.done [#allocation3], 128
    $region9: #{tpu_custom_call.1} parent=1 // pred_fallthru
      _
    %v21 = vld [vmem:[#allocation2] sm:$0xff]
    %v23 = vlaneseq
    %v24 = vshrl.u32 %v23, 7
    %v25 = vsub.s32 0, %v24
    %v26 = vrot.slane %v21, %v25
    %v27 = vlaneseq
    %v28 = vshrl.u32 %v27, 7
    %v29 = vsub.s32 1, %v28
    %v30 = vrot.slane %v21, %v29
    %v31 = vlaneseq
    %v32 = vshrl.u32 %v31, 7
    %v33 = vsub.s32 2, %v32
    %v34 = vrot.slane %v21, %v33
    %v35 = vlaneseq
    %v36 = vshrl.u32 %v35, 7
    %v37 = vsub.s32 3, %v36
    %v38 = vrot.slane %v21, %v37
    %v39 = vlaneseq
    %v40 = vshrl.u32 %v39, 7
    %v41 = vsub.s32 4, %v40
    %v42 = vrot.slane %v21, %v41
    %v43 = vlaneseq
    %v44 = vshrl.u32 %v43, 7
    %v45 = vsub.s32 5, %v44
    %v46 = vrot.slane %v21, %v45
    %v47 = vlaneseq
    %v48 = vshrl.u32 %v47, 7
    %v49 = vsub.s32 6, %v48
    %v50 = vrot.slane %v21, %v49
    %v51 = vlaneseq
    %v52 = vshrl.u32 %v51, 7
    %v53 = vsub.s32 7, %v52
    %v54 = vrot.slane %v21, %v53
    %v55 = vcombine.low %v26, %v30
    %v56 = vcombine.low %v34, %v38
    %v58 = vunpack.c.l.s4 1983009808
    %v59 = vunpack.c.0.s8 %v58
    %v60 = vlaneseq
    %v61 = vshrl.u32 %v60, 7
    %v62 = vsub.s32 %v59, %v61
    %v63 = vrot.slane %v55, %v62
    %v65 = vunpack.c.l.s4 1983009808
    %v66 = vunpack.c.0.s8 %v65
    %v67 = vlaneseq
    %v68 = vshrl.u32 %v67, 7
    %v69 = vsub.s32 %v66, %v68
    %v70 = vrot.slane %v56, %v69
    %v71 = vcombine.low %v63, %v70
    %v72 = vcombine.low %v42, %v46
    %v73 = vcombine.low %v50, %v54
    %v75 = vunpack.c.l.s4 1983009808
    %v76 = vunpack.c.0.s8 %v75
    %v77 = vlaneseq
    %v78 = vshrl.u32 %v77, 7
    %v79 = vsub.s32 %v76, %v78
    %v80 = vrot.slane %v72, %v79
    %v82 = vunpack.c.l.s4 1983009808
    %v83 = vunpack.c.0.s8 %v82
    %v84 = vlaneseq
    %v85 = vshrl.u32 %v84, 7
    %v86 = vsub.s32 %v83, %v85
    %v87 = vrot.slane %v73, %v86
    %v88 = vcombine.low %v80, %v87
    %91 = vst [vmem:[#allocation5] sm:$0xff] %v71
    %92 = vst [vmem:[#allocation5 + $0x8] sm:$0xff] %v88
    // Predicated region
    $region10: #{tpu_custom_call.1} parent=1 // pred_check
      _
    $region11: #{tpu_custom_call.1} parent=1 // pred_check_branch
      %94 = sbr.rel (0) target = $region13
    $region12: #{tpu_custom_call.1} parent=1 // pred_region
      %s96 = ssub.s32 256, 256
      %97 = vsyncadd [#allocation4], %s96
      %s99 = sshll.u32 [#allocation5], 4
      %s100 = int_to_ptr.vmem [resolvable:$true] %s99
      %102 = dma.vmem_to_hbm [thread:$0]  %s100, 256, %s1, [#allocation4]
    $region13: #{tpu_custom_call.1} parent=1 // pred_fallthru
      _
    // Predicated region
    $region14: #{tpu_custom_call.1} parent=1 // pred_check
      _
    $region15: #{tpu_custom_call.1} parent=1 // pred_check_branch
      %104 = sbr.rel (0) target = $region17
    $region16: #{tpu_custom_call.1} parent=1 // pred_region
      %105 = dma.done [#allocation4], 256
    $region17: #{tpu_custom_call.1} parent=1 // pred_fallthru
      _
    %106 = vsyncpa [#allocation3], 1
    %107 = vsyncpa [#allocation4], 1

</llo_original>
